<compile_context>
chip_gen: v7x
topology: tpu7x:2x2x1
jax: 0.10.0
libtpu: 0.0.40
codegen_flags: <defaults>
</compile_context>

<pallas_src>
import functools

import jax
import jax.numpy as jnp
from jax.experimental import pallas as pl
from jax.experimental.pallas import tpu as pltpu

LSTM_INPUT_DIM = 4
LSTM_HIDDEN_DIM = 32
LSTM_NUM_LAYERS = 2   # kernel below is written for exactly 2 layers
LSTM_OUTPUT_DIM = 2

BATCH = 2
SEQ_LEN = 8

_H = LSTM_HIDDEN_DIM
# Packed-weight row layout (all rows are 8H = 256 columns wide, gate-interleaved
# [i0 i1 f0 f1 g0 g1 o0 o1]; row offsets are multiples of 8 so every in-kernel
# row slice is sublane aligned):
_ROW_WIN = 0                    # [0:8)     wih0 (D real rows, zero padded)
_ROW_WREC = 8                   # [8:72)    fused recurrent weights [h0|h1] -> [gates0|gates1]
_ROW_FC = _ROW_WREC + 2 * _H    # [72:136)  fc weights (h0 rows and cols >= O are zero)
_W_ROWS = _ROW_FC + 2 * _H      # 136


def lstm_fc_kernel(x_ref, w_ref, b_ref, out_ref, *, seq_len):
    """x_ref:   [T*B, D]   time-major flat input (row t*B + b), B padded to 8n
       w_ref:   [136, 8H]  packed weights (layout above, gate-interleaved cols)
       b_ref:   [4, 8H]    rows: gate bias (b0/b1 interleaved), tanh scale,
                           layer-0 lane mask, fc bias
       out_ref: [B, 8H]    lane-dense store; wrapper slices [:, :O]
    """
    T = seq_len
    B = x_ref.shape[0] // T
    D, H = LSTM_INPUT_DIM, LSTM_HIDDEN_DIM
    G = 8 * H                                          # 256 output lanes per fused wave

    w_in = w_ref[_ROW_WIN:_ROW_WIN + D, :]             # [D, 8H]
    w_rec = w_ref[_ROW_WREC:_ROW_WREC + 2 * H, :]      # [2H, 8H]
    fcw = w_ref[_ROW_FC:_ROW_FC + 2 * H, :]            # [2H, 8H]

    b_row = b_ref[0:1, :]                              # [1, 8H]  b0/b1 gate-interleaved
    scale = jnp.broadcast_to(b_ref[1:2, :], (B, G))    # hoisted: 0.5 i/f/o lanes, 1.0 g lanes
    mask_l0 = b_ref[2:3, :]                            # [1, 8H]  1.0 layer-0 lanes, 0.0 layer-1
    fcb = b_ref[3:4, :]                                # [1, 8H]  fc bias in cols [0:O)

    # Hoisted off the recurrent chain: layer-0 input projection for every
    # timestep in the gate-interleaved layout; b0 lands in the layer-0 lanes and
    # b1 in the layer-1 lanes (where w_in's columns are zero). One MXU pass.
    const_all = jnp.dot(x_ref[...], w_in,
                        preferred_element_type=jnp.float32) + b_row      # [T*B, 8H]

    def cell(gates, c):
        # One EUP push for all 8 gate blocks of both layers:
        #   sigmoid(x) = 0.5 * (1 + tanh(x / 2)) on i/f/o lanes, tanh(x) on g lanes.
        th = jnp.tanh(gates * scale)                   # [B, 8H]
        sg = 0.5 + 0.5 * th
        i = sg[:, 0 * 2 * H:1 * 2 * H]                 # [i0|i1]
        f = sg[:, 1 * 2 * H:2 * 2 * H]                 # [f0|f1]
        g = th[:, 2 * 2 * H:3 * 2 * H]                 # [g0|g1]
        o = sg[:, 3 * 2 * H:4 * 2 * H]                 # [o0|o1]
        c_new = f * c + i * g                          # [c0|c1]
        h_new = o * jnp.tanh(c_new)                    # [h0|h1] == next wave's matmul input
        return h_new, c_new

    # Wavefront schedule: wave w runs layer 0 at t=w and layer 1 at t=w-1.
    # Wave 0: h=c=0, so no matmul is needed; masking the layer-1 gate lanes to
    # zero keeps h1/c1 at exactly 0 (sigmoid(0)*tanh(0) terms vanish with c=0).
    gates = const_all[0:B, :] * mask_l0
    h, c = cell(gates, jnp.zeros((B, 2 * H), jnp.float32))

    # Waves 1 .. T-1 (fully unrolled): one fused 256-lane MXU push per wave,
    # contiguous sublane-aligned const slice (off the recurrent chain).
    for w in range(1, T):
        gates = (jnp.dot(h, w_rec, preferred_element_type=jnp.float32)
                 + const_all[w * B:(w + 1) * B, :])
        h, c = cell(gates, c)

    # Wave T: layer 1 finishes t=T-1; the layer-0 half is computed but unused
    # (its fc rows are zero). TODO(synk): on v7x the +const adds could ride the
    # MRB matmul accumulate instead of the VPU; neutral on v5e/v6e so not done.
    gates = jnp.dot(h, w_rec, preferred_element_type=jnp.float32) + b_row
    h, c = cell(gates, c)

    # fc(h1_last): fcw's h0 rows are zero so no lane slice of h is needed;
    # lane-dense (multiple-of-128) unmasked store, wrapper slices [:, :O].
    out_ref[...] = jnp.dot(h, fcw, preferred_element_type=jnp.float32) + fcb


def lstm_model_forward(x, packed_params):
    """x: [B, T, D] (batch_first, like PyTorch). Returns [B, LSTM_OUTPUT_DIM]."""
    w_all, b_all = packed_params
    B, T, D = x.shape
    BP = 8 * pl.cdiv(B, 8)     # pad batch to full 8-sublane vregs / MXU rows

    x_p = jnp.zeros((BP, T, D), jnp.float32).at[:B].set(x.astype(jnp.float32))
    # One-time XLA-side transpose of a tiny array -> time-major flat input so
    # the kernel's per-wave slice is a contiguous, tile-aligned row block.
    x_tm = x_p.transpose(1, 0, 2).reshape(T * BP, D)

    vmem = pl.BlockSpec(memory_space=pltpu.MemorySpace.VMEM)
    out = pl.pallas_call(
        functools.partial(lstm_fc_kernel, seq_len=T),
        out_shape=jax.ShapeDtypeStruct((BP, 8 * LSTM_HIDDEN_DIM), jnp.float32),
        in_specs=[vmem, vmem, vmem],
        out_specs=vmem,
    )(x_tm, w_all, b_all)
    return out[:B, :LSTM_OUTPUT_DIM]


def init_params(key):
    """Deterministic init; mimics PyTorch uniform(-1/sqrt(H), 1/sqrt(H)).
    Natural layout, pre-transposed for row-major [B,K]@[K,N]; gate order i,f,g,o:
      wih_l : [in_dim, 4H],  whh_l : [H, 4H],  b_l : [1, 4H] (= b_ih + b_hh)
      fcw   : [H, O],        fcb   : [1, O]
    """
    H, D, O = LSTM_HIDDEN_DIM, LSTM_INPUT_DIM, LSTM_OUTPUT_DIM
    k = 1.0 / jnp.sqrt(jnp.float32(H))
    keys = jax.random.split(key, 12)
    u = lambda kk, shape: jax.random.uniform(kk, shape, jnp.float32, -k, k)
    return {
        "wih0": u(keys[0], (D, 4 * H)),
        "whh0": u(keys[1], (H, 4 * H)),
        "b0":   (u(keys[2], (1, 4 * H)) + u(keys[3], (1, 4 * H))),
        "wih1": u(keys[4], (H, 4 * H)),
        "whh1": u(keys[5], (H, 4 * H)),
        "b1":   (u(keys[6], (1, 4 * H)) + u(keys[7], (1, 4 * H))),
        "fcw":  u(keys[8], (H, O)),
        "fcb":  u(keys[9], (1, O)),
    }


def pack_params(params):
    """One-time packing into 2 arrays (gate-interleaved 256-lane layout)."""
    H, D, O = LSTM_HIDDEN_DIM, LSTM_INPUT_DIM, LSTM_OUTPUT_DIM

    def ilv(m0, m1):
        # Interleave gate blocks: output columns [i0 i1 f0 f1 g0 g1 o0 o1].
        cols = []
        for g in range(4):
            cols.append(m0[:, g * H:(g + 1) * H])
            cols.append(m1[:, g * H:(g + 1) * H])
        return jnp.concatenate(cols, axis=1)

    z_d = jnp.zeros((D, 4 * H), jnp.float32)
    z_h = jnp.zeros((H, 4 * H), jnp.float32)

    # Input projection: wih0 feeds the layer-0 lanes, layer-1 lanes stay zero.
    w_in = jnp.zeros((_ROW_WREC, 8 * H), jnp.float32).at[:D].set(ilv(params["wih0"], z_d))
    # Fused recurrence: rows [0:H) multiply h0 -> (whh0 | wih1),
    #                   rows [H:2H) multiply h1 -> (0 | whh1).
    w_rec = jnp.concatenate([ilv(params["whh0"], params["wih1"]),
                             ilv(z_h, params["whh1"])], axis=0)           # [2H, 8H]
    # fc: only the h1 rows / first O columns are nonzero.
    fcw_p = jnp.zeros((2 * H, 8 * H), jnp.float32).at[H:2 * H, :O].set(params["fcw"])
    w_all = jnp.concatenate([w_in, w_rec, fcw_p], axis=0)                 # [136, 8H]
    assert w_all.shape == (_W_ROWS, 8 * H)

    b_row = ilv(params["b0"], params["b1"])                               # [1, 8H]
    scale = jnp.concatenate([jnp.full((1, 2 * H), 0.5, jnp.float32),      # i lanes
                             jnp.full((1, 2 * H), 0.5, jnp.float32),      # f lanes
                             jnp.full((1, 2 * H), 1.0, jnp.float32),      # g lanes
                             jnp.full((1, 2 * H), 0.5, jnp.float32)],     # o lanes
                            axis=1)
    mask_l0 = ilv(jnp.ones((1, 4 * H), jnp.float32), jnp.zeros((1, 4 * H), jnp.float32))
    fcb_p = jnp.zeros((1, 8 * H), jnp.float32).at[:, :O].set(params["fcb"])
    b_all = jnp.concatenate([b_row, scale, mask_l0, fcb_p], axis=0)       # [4, 8H]
    return w_all, b_all


def reference_forward(x, params):
    """Pure-JAX reference of the same forward pass (for sanity checking)."""
    H = LSTM_HIDDEN_DIM
    B, T, _ = x.shape

    def cell(x_t, h, c, wih, whh, b):
        gates = x_t @ wih + h @ whh + b
        i = jax.nn.sigmoid(gates[:, 0 * H:1 * H])
        f = jax.nn.sigmoid(gates[:, 1 * H:2 * H])
        g = jnp.tanh(gates[:, 2 * H:3 * H])
        o = jax.nn.sigmoid(gates[:, 3 * H:4 * H])
        c_new = f * c + i * g
        return o * jnp.tanh(c_new), c_new

    h0 = c0 = h1 = c1 = jnp.zeros((B, H), jnp.float32)
    for t in range(T):
        x_t = x[:, t, :].astype(jnp.float32)
        h0, c0 = cell(x_t, h0, c0, params["wih0"], params["whh0"], params["b0"])
        h1, c1 = cell(h0, h1, c1, params["wih1"], params["whh1"], params["b1"])
    return h1 @ params["fcw"] + params["fcb"]


if __name__ == "__main__":
    key = jax.random.PRNGKey(0)
    kx, kp = jax.random.split(key)
    x = jax.random.normal(kx, (BATCH, SEQ_LEN, LSTM_INPUT_DIM), jnp.float32)
    params = init_params(kp)
    packed = pack_params(params)

    out = lstm_model_forward(x, packed)
    out = jax.block_until_ready(out)

    ref = reference_forward(x, params)
    assert out.shape == (BATCH, LSTM_OUTPUT_DIM)
    assert jnp.allclose(out, ref, atol=1e-4, rtol=1e-3), (out, ref)

    print("KERNEL_OK")
</pallas_src>

<mosaic_0001>
module attributes {stable_mosaic.version = 11 : i64} {
  func.func @lstm_fc_kernel(%arg0: memref<64x4xf32, #tpu.memory_space<vmem>>, %arg1: memref<136x256xf32, #tpu.memory_space<vmem>>, %arg2: memref<4x256xf32, #tpu.memory_space<vmem>>, %arg3: memref<8x256xf32, #tpu.memory_space<vmem>>) attributes {dimension_semantics = [], scalar_prefetch = 0 : i64, scratch_operands = 0 : i64, tpu.core_type = #tpu.core_type<tc>} {
    %c0 = arith.constant 0 : index
    %c0_0 = arith.constant 0 : index
    %0 = vector.load %arg1[%c0, %c0_0] : memref<136x256xf32, #tpu.memory_space<vmem>>, vector<4x256xf32>
    %c8 = arith.constant 8 : index
    %c0_1 = arith.constant 0 : index
    %1 = vector.load %arg1[%c8, %c0_1] : memref<136x256xf32, #tpu.memory_space<vmem>>, vector<64x256xf32>
    %c72 = arith.constant 72 : index
    %c0_2 = arith.constant 0 : index
    %2 = vector.load %arg1[%c72, %c0_2] : memref<136x256xf32, #tpu.memory_space<vmem>>, vector<64x256xf32>
    %c0_3 = arith.constant 0 : index
    %c0_4 = arith.constant 0 : index
    %3 = vector.load %arg2[%c0_3, %c0_4] : memref<4x256xf32, #tpu.memory_space<vmem>>, vector<1x256xf32>
    %c1 = arith.constant 1 : index
    %c0_5 = arith.constant 0 : index
    %4 = vector.load %arg2[%c1, %c0_5] : memref<4x256xf32, #tpu.memory_space<vmem>>, vector<1x256xf32>
    %5 = vector.shape_cast %4 : vector<1x256xf32> to vector<1x256xf32>
    %6 = vector.broadcast %5 : vector<1x256xf32> to vector<8x256xf32>
    %c2 = arith.constant 2 : index
    %c0_6 = arith.constant 0 : index
    %7 = vector.load %arg2[%c2, %c0_6] : memref<4x256xf32, #tpu.memory_space<vmem>>, vector<1x256xf32>
    %c3 = arith.constant 3 : index
    %c0_7 = arith.constant 0 : index
    %8 = vector.load %arg2[%c3, %c0_7] : memref<4x256xf32, #tpu.memory_space<vmem>>, vector<1x256xf32>
    %c0_8 = arith.constant 0 : index
    %c0_9 = arith.constant 0 : index
    %9 = vector.load %arg0[%c0_8, %c0_9] : memref<64x4xf32, #tpu.memory_space<vmem>>, vector<64x4xf32>
    %cst = arith.constant dense<0.000000e+00> : vector<64x256xf32>
    %10 = tpu.matmul %9, %0, %cst {dimension_numbers = #tpu.dot_dimension_numbers<[1], [0], [0], [1], [0, 0, 1, 1], [], []>} : vector<64x4xf32>, vector<4x256xf32>, vector<64x256xf32> -> vector<64x256xf32>
    %11 = vector.broadcast %3 : vector<1x256xf32> to vector<64x256xf32>
    %12 = arith.addf %10, %11 : vector<64x256xf32>
    %13 = vector.extract_strided_slice %12 {offsets = [0, 0], sizes = [8, 256], strides = [1, 1]} : vector<64x256xf32> to vector<8x256xf32>
    %14 = vector.broadcast %7 : vector<1x256xf32> to vector<8x256xf32>
    %15 = arith.mulf %13, %14 : vector<8x256xf32>
    %cst_10 = arith.constant 0.000000e+00 : f32
    %16 = vector.broadcast %cst_10 : f32 to vector<8x64xf32>
    %17 = arith.mulf %15, %6 : vector<8x256xf32>
    %18 = math.tanh %17 : vector<8x256xf32>
    %cst_11 = arith.constant 5.000000e-01 : f32
    %19 = vector.broadcast %cst_11 : f32 to vector<8x256xf32>
    %20 = arith.mulf %19, %18 : vector<8x256xf32>
    %cst_12 = arith.constant 5.000000e-01 : f32
    %21 = vector.broadcast %cst_12 : f32 to vector<8x256xf32>
    %22 = arith.addf %21, %20 : vector<8x256xf32>
    %23 = vector.extract_strided_slice %22 {offsets = [0, 0], sizes = [8, 64], strides = [1, 1]} : vector<8x256xf32> to vector<8x64xf32>
    %24 = vector.extract_strided_slice %22 {offsets = [0, 64], sizes = [8, 64], strides = [1, 1]} : vector<8x256xf32> to vector<8x64xf32>
    %25 = vector.extract_strided_slice %18 {offsets = [0, 128], sizes = [8, 64], strides = [1, 1]} : vector<8x256xf32> to vector<8x64xf32>
    %26 = vector.extract_strided_slice %22 {offsets = [0, 192], sizes = [8, 64], strides = [1, 1]} : vector<8x256xf32> to vector<8x64xf32>
    %27 = arith.mulf %24, %16 : vector<8x64xf32>
    %28 = arith.mulf %23, %25 : vector<8x64xf32>
    %29 = arith.addf %27, %28 : vector<8x64xf32>
    %30 = math.tanh %29 : vector<8x64xf32>
    %31 = arith.mulf %26, %30 : vector<8x64xf32>
    %cst_13 = arith.constant dense<0.000000e+00> : vector<8x256xf32>
    %32 = tpu.matmul %31, %1, %cst_13 {dimension_numbers = #tpu.dot_dimension_numbers<[1], [0], [0], [1], [0, 0, 1, 1], [], []>} : vector<8x64xf32>, vector<64x256xf32>, vector<8x256xf32> -> vector<8x256xf32>
    %33 = vector.extract_strided_slice %12 {offsets = [8, 0], sizes = [8, 256], strides = [1, 1]} : vector<64x256xf32> to vector<8x256xf32>
    %34 = arith.addf %32, %33 : vector<8x256xf32>
    %35 = arith.mulf %34, %6 : vector<8x256xf32>
    %36 = math.tanh %35 : vector<8x256xf32>
    %cst_14 = arith.constant 5.000000e-01 : f32
    %37 = vector.broadcast %cst_14 : f32 to vector<8x256xf32>
    %38 = arith.mulf %37, %36 : vector<8x256xf32>
    %cst_15 = arith.constant 5.000000e-01 : f32
    %39 = vector.broadcast %cst_15 : f32 to vector<8x256xf32>
    %40 = arith.addf %39, %38 : vector<8x256xf32>
    %41 = vector.extract_strided_slice %40 {offsets = [0, 0], sizes = [8, 64], strides = [1, 1]} : vector<8x256xf32> to vector<8x64xf32>
    %42 = vector.extract_strided_slice %40 {offsets = [0, 64], sizes = [8, 64], strides = [1, 1]} : vector<8x256xf32> to vector<8x64xf32>
    %43 = vector.extract_strided_slice %36 {offsets = [0, 128], sizes = [8, 64], strides = [1, 1]} : vector<8x256xf32> to vector<8x64xf32>
    %44 = vector.extract_strided_slice %40 {offsets = [0, 192], sizes = [8, 64], strides = [1, 1]} : vector<8x256xf32> to vector<8x64xf32>
    %45 = arith.mulf %42, %29 : vector<8x64xf32>
    %46 = arith.mulf %41, %43 : vector<8x64xf32>
    %47 = arith.addf %45, %46 : vector<8x64xf32>
    %48 = math.tanh %47 : vector<8x64xf32>
    %49 = arith.mulf %44, %48 : vector<8x64xf32>
    %cst_16 = arith.constant dense<0.000000e+00> : vector<8x256xf32>
    %50 = tpu.matmul %49, %1, %cst_16 {dimension_numbers = #tpu.dot_dimension_numbers<[1], [0], [0], [1], [0, 0, 1, 1], [], []>} : vector<8x64xf32>, vector<64x256xf32>, vector<8x256xf32> -> vector<8x256xf32>
    %51 = vector.extract_strided_slice %12 {offsets = [16, 0], sizes = [8, 256], strides = [1, 1]} : vector<64x256xf32> to vector<8x256xf32>
    %52 = arith.addf %50, %51 : vector<8x256xf32>
    %53 = arith.mulf %52, %6 : vector<8x256xf32>
    %54 = math.tanh %53 : vector<8x256xf32>
    %cst_17 = arith.constant 5.000000e-01 : f32
    %55 = vector.broadcast %cst_17 : f32 to vector<8x256xf32>
    %56 = arith.mulf %55, %54 : vector<8x256xf32>
    %cst_18 = arith.constant 5.000000e-01 : f32
    %57 = vector.broadcast %cst_18 : f32 to vector<8x256xf32>
    %58 = arith.addf %57, %56 : vector<8x256xf32>
    %59 = vector.extract_strided_slice %58 {offsets = [0, 0], sizes = [8, 64], strides = [1, 1]} : vector<8x256xf32> to vector<8x64xf32>
    %60 = vector.extract_strided_slice %58 {offsets = [0, 64], sizes = [8, 64], strides = [1, 1]} : vector<8x256xf32> to vector<8x64xf32>
    %61 = vector.extract_strided_slice %54 {offsets = [0, 128], sizes = [8, 64], strides = [1, 1]} : vector<8x256xf32> to vector<8x64xf32>
    %62 = vector.extract_strided_slice %58 {offsets = [0, 192], sizes = [8, 64], strides = [1, 1]} : vector<8x256xf32> to vector<8x64xf32>
    %63 = arith.mulf %60, %47 : vector<8x64xf32>
    %64 = arith.mulf %59, %61 : vector<8x64xf32>
    %65 = arith.addf %63, %64 : vector<8x64xf32>
    %66 = math.tanh %65 : vector<8x64xf32>
    %67 = arith.mulf %62, %66 : vector<8x64xf32>
    %cst_19 = arith.constant dense<0.000000e+00> : vector<8x256xf32>
    %68 = tpu.matmul %67, %1, %cst_19 {dimension_numbers = #tpu.dot_dimension_numbers<[1], [0], [0], [1], [0, 0, 1, 1], [], []>} : vector<8x64xf32>, vector<64x256xf32>, vector<8x256xf32> -> vector<8x256xf32>
    %69 = vector.extract_strided_slice %12 {offsets = [24, 0], sizes = [8, 256], strides = [1, 1]} : vector<64x256xf32> to vector<8x256xf32>
    %70 = arith.addf %68, %69 : vector<8x256xf32>
    %71 = arith.mulf %70, %6 : vector<8x256xf32>
    %72 = math.tanh %71 : vector<8x256xf32>
    %cst_20 = arith.constant 5.000000e-01 : f32
    %73 = vector.broadcast %cst_20 : f32 to vector<8x256xf32>
    %74 = arith.mulf %73, %72 : vector<8x256xf32>
    %cst_21 = arith.constant 5.000000e-01 : f32
    %75 = vector.broadcast %cst_21 : f32 to vector<8x256xf32>
    %76 = arith.addf %75, %74 : vector<8x256xf32>
    %77 = vector.extract_strided_slice %76 {offsets = [0, 0], sizes = [8, 64], strides = [1, 1]} : vector<8x256xf32> to vector<8x64xf32>
    %78 = vector.extract_strided_slice %76 {offsets = [0, 64], sizes = [8, 64], strides = [1, 1]} : vector<8x256xf32> to vector<8x64xf32>
    %79 = vector.extract_strided_slice %72 {offsets = [0, 128], sizes = [8, 64], strides = [1, 1]} : vector<8x256xf32> to vector<8x64xf32>
    %80 = vector.extract_strided_slice %76 {offsets = [0, 192], sizes = [8, 64], strides = [1, 1]} : vector<8x256xf32> to vector<8x64xf32>
    %81 = arith.mulf %78, %65 : vector<8x64xf32>
    %82 = arith.mulf %77, %79 : vector<8x64xf32>
    %83 = arith.addf %81, %82 : vector<8x64xf32>
    %84 = math.tanh %83 : vector<8x64xf32>
    %85 = arith.mulf %80, %84 : vector<8x64xf32>
    %cst_22 = arith.constant dense<0.000000e+00> : vector<8x256xf32>
    %86 = tpu.matmul %85, %1, %cst_22 {dimension_numbers = #tpu.dot_dimension_numbers<[1], [0], [0], [1], [0, 0, 1, 1], [], []>} : vector<8x64xf32>, vector<64x256xf32>, vector<8x256xf32> -> vector<8x256xf32>
    %87 = vector.extract_strided_slice %12 {offsets = [32, 0], sizes = [8, 256], strides = [1, 1]} : vector<64x256xf32> to vector<8x256xf32>
    %88 = arith.addf %86, %87 : vector<8x256xf32>
    %89 = arith.mulf %88, %6 : vector<8x256xf32>
    %90 = math.tanh %89 : vector<8x256xf32>
    %cst_23 = arith.constant 5.000000e-01 : f32
    %91 = vector.broadcast %cst_23 : f32 to vector<8x256xf32>
    %92 = arith.mulf %91, %90 : vector<8x256xf32>
    %cst_24 = arith.constant 5.000000e-01 : f32
    %93 = vector.broadcast %cst_24 : f32 to vector<8x256xf32>
    %94 = arith.addf %93, %92 : vector<8x256xf32>
    %95 = vector.extract_strided_slice %94 {offsets = [0, 0], sizes = [8, 64], strides = [1, 1]} : vector<8x256xf32> to vector<8x64xf32>
    %96 = vector.extract_strided_slice %94 {offsets = [0, 64], sizes = [8, 64], strides = [1, 1]} : vector<8x256xf32> to vector<8x64xf32>
    %97 = vector.extract_strided_slice %90 {offsets = [0, 128], sizes = [8, 64], strides = [1, 1]} : vector<8x256xf32> to vector<8x64xf32>
    %98 = vector.extract_strided_slice %94 {offsets = [0, 192], sizes = [8, 64], strides = [1, 1]} : vector<8x256xf32> to vector<8x64xf32>
    %99 = arith.mulf %96, %83 : vector<8x64xf32>
    %100 = arith.mulf %95, %97 : vector<8x64xf32>
    %101 = arith.addf %99, %100 : vector<8x64xf32>
    %102 = math.tanh %101 : vector<8x64xf32>
    %103 = arith.mulf %98, %102 : vector<8x64xf32>
    %cst_25 = arith.constant dense<0.000000e+00> : vector<8x256xf32>
    %104 = tpu.matmul %103, %1, %cst_25 {dimension_numbers = #tpu.dot_dimension_numbers<[1], [0], [0], [1], [0, 0, 1, 1], [], []>} : vector<8x64xf32>, vector<64x256xf32>, vector<8x256xf32> -> vector<8x256xf32>
    %105 = vector.extract_strided_slice %12 {offsets = [40, 0], sizes = [8, 256], strides = [1, 1]} : vector<64x256xf32> to vector<8x256xf32>
    %106 = arith.addf %104, %105 : vector<8x256xf32>
    %107 = arith.mulf %106, %6 : vector<8x256xf32>
    %108 = math.tanh %107 : vector<8x256xf32>
    %cst_26 = arith.constant 5.000000e-01 : f32
    %109 = vector.broadcast %cst_26 : f32 to vector<8x256xf32>
    %110 = arith.mulf %109, %108 : vector<8x256xf32>
    %cst_27 = arith.constant 5.000000e-01 : f32
    %111 = vector.broadcast %cst_27 : f32 to vector<8x256xf32>
    %112 = arith.addf %111, %110 : vector<8x256xf32>
    %113 = vector.extract_strided_slice %112 {offsets = [0, 0], sizes = [8, 64], strides = [1, 1]} : vector<8x256xf32> to vector<8x64xf32>
    %114 = vector.extract_strided_slice %112 {offsets = [0, 64], sizes = [8, 64], strides = [1, 1]} : vector<8x256xf32> to vector<8x64xf32>
    %115 = vector.extract_strided_slice %108 {offsets = [0, 128], sizes = [8, 64], strides = [1, 1]} : vector<8x256xf32> to vector<8x64xf32>
    %116 = vector.extract_strided_slice %112 {offsets = [0, 192], sizes = [8, 64], strides = [1, 1]} : vector<8x256xf32> to vector<8x64xf32>
    %117 = arith.mulf %114, %101 : vector<8x64xf32>
    %118 = arith.mulf %113, %115 : vector<8x64xf32>
    %119 = arith.addf %117, %118 : vector<8x64xf32>
    %120 = math.tanh %119 : vector<8x64xf32>
    %121 = arith.mulf %116, %120 : vector<8x64xf32>
    %cst_28 = arith.constant dense<0.000000e+00> : vector<8x256xf32>
    %122 = tpu.matmul %121, %1, %cst_28 {dimension_numbers = #tpu.dot_dimension_numbers<[1], [0], [0], [1], [0, 0, 1, 1], [], []>} : vector<8x64xf32>, vector<64x256xf32>, vector<8x256xf32> -> vector<8x256xf32>
    %123 = vector.extract_strided_slice %12 {offsets = [48, 0], sizes = [8, 256], strides = [1, 1]} : vector<64x256xf32> to vector<8x256xf32>
    %124 = arith.addf %122, %123 : vector<8x256xf32>
    %125 = arith.mulf %124, %6 : vector<8x256xf32>
    %126 = math.tanh %125 : vector<8x256xf32>
    %cst_29 = arith.constant 5.000000e-01 : f32
    %127 = vector.broadcast %cst_29 : f32 to vector<8x256xf32>
    %128 = arith.mulf %127, %126 : vector<8x256xf32>
    %cst_30 = arith.constant 5.000000e-01 : f32
    %129 = vector.broadcast %cst_30 : f32 to vector<8x256xf32>
    %130 = arith.addf %129, %128 : vector<8x256xf32>
    %131 = vector.extract_strided_slice %130 {offsets = [0, 0], sizes = [8, 64], strides = [1, 1]} : vector<8x256xf32> to vector<8x64xf32>
    %132 = vector.extract_strided_slice %130 {offsets = [0, 64], sizes = [8, 64], strides = [1, 1]} : vector<8x256xf32> to vector<8x64xf32>
    %133 = vector.extract_strided_slice %126 {offsets = [0, 128], sizes = [8, 64], strides = [1, 1]} : vector<8x256xf32> to vector<8x64xf32>
    %134 = vector.extract_strided_slice %130 {offsets = [0, 192], sizes = [8, 64], strides = [1, 1]} : vector<8x256xf32> to vector<8x64xf32>
    %135 = arith.mulf %132, %119 : vector<8x64xf32>
    %136 = arith.mulf %131, %133 : vector<8x64xf32>
    %137 = arith.addf %135, %136 : vector<8x64xf32>
    %138 = math.tanh %137 : vector<8x64xf32>
    %139 = arith.mulf %134, %138 : vector<8x64xf32>
    %cst_31 = arith.constant dense<0.000000e+00> : vector<8x256xf32>
    %140 = tpu.matmul %139, %1, %cst_31 {dimension_numbers = #tpu.dot_dimension_numbers<[1], [0], [0], [1], [0, 0, 1, 1], [], []>} : vector<8x64xf32>, vector<64x256xf32>, vector<8x256xf32> -> vector<8x256xf32>
    %141 = vector.extract_strided_slice %12 {offsets = [56, 0], sizes = [8, 256], strides = [1, 1]} : vector<64x256xf32> to vector<8x256xf32>
    %142 = arith.addf %140, %141 : vector<8x256xf32>
    %143 = arith.mulf %142, %6 : vector<8x256xf32>
    %144 = math.tanh %143 : vector<8x256xf32>
    %cst_32 = arith.constant 5.000000e-01 : f32
    %145 = vector.broadcast %cst_32 : f32 to vector<8x256xf32>
    %146 = arith.mulf %145, %144 : vector<8x256xf32>
    %cst_33 = arith.constant 5.000000e-01 : f32
    %147 = vector.broadcast %cst_33 : f32 to vector<8x256xf32>
    %148 = arith.addf %147, %146 : vector<8x256xf32>
    %149 = vector.extract_strided_slice %148 {offsets = [0, 0], sizes = [8, 64], strides = [1, 1]} : vector<8x256xf32> to vector<8x64xf32>
    %150 = vector.extract_strided_slice %148 {offsets = [0, 64], sizes = [8, 64], strides = [1, 1]} : vector<8x256xf32> to vector<8x64xf32>
    %151 = vector.extract_strided_slice %144 {offsets = [0, 128], sizes = [8, 64], strides = [1, 1]} : vector<8x256xf32> to vector<8x64xf32>
    %152 = vector.extract_strided_slice %148 {offsets = [0, 192], sizes = [8, 64], strides = [1, 1]} : vector<8x256xf32> to vector<8x64xf32>
    %153 = arith.mulf %150, %137 : vector<8x64xf32>
    %154 = arith.mulf %149, %151 : vector<8x64xf32>
    %155 = arith.addf %153, %154 : vector<8x64xf32>
    %156 = math.tanh %155 : vector<8x64xf32>
    %157 = arith.mulf %152, %156 : vector<8x64xf32>
    %cst_34 = arith.constant dense<0.000000e+00> : vector<8x256xf32>
    %158 = tpu.matmul %157, %1, %cst_34 {dimension_numbers = #tpu.dot_dimension_numbers<[1], [0], [0], [1], [0, 0, 1, 1], [], []>} : vector<8x64xf32>, vector<64x256xf32>, vector<8x256xf32> -> vector<8x256xf32>
    %159 = vector.broadcast %3 : vector<1x256xf32> to vector<8x256xf32>
    %160 = arith.addf %158, %159 : vector<8x256xf32>
    %161 = arith.mulf %160, %6 : vector<8x256xf32>
    %162 = math.tanh %161 : vector<8x256xf32>
    %cst_35 = arith.constant 5.000000e-01 : f32
    %163 = vector.broadcast %cst_35 : f32 to vector<8x256xf32>
    %164 = arith.mulf %163, %162 : vector<8x256xf32>
    %cst_36 = arith.constant 5.000000e-01 : f32
    %165 = vector.broadcast %cst_36 : f32 to vector<8x256xf32>
    %166 = arith.addf %165, %164 : vector<8x256xf32>
    %167 = vector.extract_strided_slice %166 {offsets = [0, 0], sizes = [8, 64], strides = [1, 1]} : vector<8x256xf32> to vector<8x64xf32>
    %168 = vector.extract_strided_slice %166 {offsets = [0, 64], sizes = [8, 64], strides = [1, 1]} : vector<8x256xf32> to vector<8x64xf32>
    %169 = vector.extract_strided_slice %162 {offsets = [0, 128], sizes = [8, 64], strides = [1, 1]} : vector<8x256xf32> to vector<8x64xf32>
    %170 = vector.extract_strided_slice %166 {offsets = [0, 192], sizes = [8, 64], strides = [1, 1]} : vector<8x256xf32> to vector<8x64xf32>
    %171 = arith.mulf %168, %155 : vector<8x64xf32>
    %172 = arith.mulf %167, %169 : vector<8x64xf32>
    %173 = arith.addf %171, %172 : vector<8x64xf32>
    %174 = math.tanh %173 : vector<8x64xf32>
    %175 = arith.mulf %170, %174 : vector<8x64xf32>
    %cst_37 = arith.constant dense<0.000000e+00> : vector<8x256xf32>
    %176 = tpu.matmul %175, %2, %cst_37 {dimension_numbers = #tpu.dot_dimension_numbers<[1], [0], [0], [1], [0, 0, 1, 1], [], []>} : vector<8x64xf32>, vector<64x256xf32>, vector<8x256xf32> -> vector<8x256xf32>
    %177 = vector.broadcast %8 : vector<1x256xf32> to vector<8x256xf32>
    %178 = arith.addf %176, %177 : vector<8x256xf32>
    %c0_38 = arith.constant 0 : index
    %c0_39 = arith.constant 0 : index
    %179 = vector.load %arg3[%c0_38, %c0_39] : memref<8x256xf32, #tpu.memory_space<vmem>>, vector<8x256xf32>
    tpu.vector_store %arg3[%c0_38, %c0_39], %178 {strides = array<i32>} : memref<8x256xf32, #tpu.memory_space<vmem>>, vector<8x256xf32>,
    return
  }
}

</mosaic_0001>

<llo_original>
// kernel: tpu_custom_call.1
$region0: #{tpu_custom_call.1}
  #allocation0 [shape = 'u32[]', space=smem, size = 0x4, offset = 0x4, fixed_abs, tag = 'smem constant byte address 0x4 - core index']
  #allocation1 [shape = 'u32[144,128]{1,0:T(1,128)}', space=vmem, size = 0x12000, scoped, tag = 'internal scratch']
  %s0 = inlined_call_operand.vmem [shape: f32[64,4], index: 0, kind: input, shape index: {}]
  %s1 = inlined_call_operand.hbm [shape: f32[136,256], index: 1, kind: input, shape index: {}]
  %s2 = inlined_call_operand.vmem [shape: f32[4,256], index: 2, kind: input, shape index: {}]
  %s3 = inlined_call_operand.hbm [shape: f32[8,256], index: 3, kind: output, shape index: {}]
  %s4 = sld [smem:[#allocation0]]
  $region26: #{tpu_custom_call.1} parent=0
    _
  %s6 = ssub.s32 1, %s4
  %s7 = scalar_select 0, %s6, %s4
  $region1: #{tpu_custom_call.1} parent=0
    #allocation2 [shape = 'u8[139264]{0}', space=vmem, size = 0x22000, scoped, tag = 'input window, operand 1, single buffered']
    #allocation3 [shape = 's32[1]{0}', space=sflag, size = 0x4, scoped, tag = 'scoped memory for tpu_custom_call.1']
    #allocation4 [shape = 's32[1]{0}', space=sflag, size = 0x4, scoped, tag = 'scoped memory for tpu_custom_call.1']
    #allocation5 [shape = 'u8[8192]{0}', space=vmem, size = 0x2000, scoped, tag = 'output window, operand 0, single buffered']
    %8 = vsyncpa [#allocation3], 0
    %9 = vsyncpa [#allocation4], 0
    // Predicated region
    $region2: #{tpu_custom_call.1} parent=1 // pred_check
      _
    $region3: #{tpu_custom_call.1} parent=1 // pred_check_branch
      %11 = sbr.rel (0) target = $region5
    $region4: #{tpu_custom_call.1} parent=1 // pred_region
      _
    $region5: #{tpu_custom_call.1} parent=1 // pred_fallthru
      _
    // Predicated region
    $region6: #{tpu_custom_call.1} parent=1 // pred_check
      _
    $region7: #{tpu_custom_call.1} parent=1 // pred_check_branch
      %13 = sbr.rel (0) target = $region9
    $region8: #{tpu_custom_call.1} parent=1 // pred_region
      %s15 = ssub.s32 4352, 4352
      %16 = vsyncadd [#allocation3], %s15
      %s17 = sshll.u32 [#allocation2], 4
      %s18 = int_to_ptr.vmem [resolvable:$true] %s17
      %23 = dma.hbm_to_vmem [thread:$0]  %s1, 4352, %s18, [#allocation3], 256, 256, 16
    $region9: #{tpu_custom_call.1} parent=1 // pred_fallthru
      _
    // Predicated region
    $region10: #{tpu_custom_call.1} parent=1 // pred_check
      _
    $region11: #{tpu_custom_call.1} parent=1 // pred_check_branch
      %25 = sbr.rel (0) target = $region13
    $region12: #{tpu_custom_call.1} parent=1 // pred_region
      _
    $region13: #{tpu_custom_call.1} parent=1 // pred_fallthru
      _
    // Predicated region
    $region14: #{tpu_custom_call.1} parent=1 // pred_check
      _
    $region15: #{tpu_custom_call.1} parent=1 // pred_check_branch
      %27 = sbr.rel (0) target = $region17
    $region16: #{tpu_custom_call.1} parent=1 // pred_region
      %28 = dma.done [#allocation3], 4352
    $region17: #{tpu_custom_call.1} parent=1 // pred_fallthru
      _
    %v29 = vld [vmem:[#allocation2] sm:$0xf]
    %v30 = vld [vmem:[#allocation2 + $0x8] sm:$0xf]
    %v31 = vld [vmem:[#allocation2 + $0x10] sm:$0xff]
    %v32 = vld [vmem:[#allocation2 + $0x18] sm:$0xff]
    %v33 = vld [vmem:[#allocation2 + $0x20] sm:$0xff]
    %v34 = vld [vmem:[#allocation2 + $0x28] sm:$0xff]
    %v35 = vld [vmem:[#allocation2 + $0x30] sm:$0xff]
    %v36 = vld [vmem:[#allocation2 + $0x38] sm:$0xff]
    %v37 = vld [vmem:[#allocation2 + $0x40] sm:$0xff]
    %v38 = vld [vmem:[#allocation2 + $0x48] sm:$0xff]
    %v39 = vld [vmem:[#allocation2 + $0x50] sm:$0xff]
    %v40 = vld [vmem:[#allocation2 + $0x58] sm:$0xff]
    %v41 = vld [vmem:[#allocation2 + $0x60] sm:$0xff]
    %v42 = vld [vmem:[#allocation2 + $0x68] sm:$0xff]
    %v43 = vld [vmem:[#allocation2 + $0x70] sm:$0xff]
    %v44 = vld [vmem:[#allocation2 + $0x78] sm:$0xff]
    %v45 = vld [vmem:[#allocation2 + $0x80] sm:$0xff]
    %v46 = vld [vmem:[#allocation2 + $0x88] sm:$0xff]
    %v47 = vld [vmem:[#allocation2 + $0x90] sm:$0xff]
    %v48 = vld [vmem:[#allocation2 + $0x98] sm:$0xff]
    %v49 = vld [vmem:[#allocation2 + $0xa0] sm:$0xff]
    %v50 = vld [vmem:[#allocation2 + $0xa8] sm:$0xff]
    %v51 = vld [vmem:[#allocation2 + $0xb0] sm:$0xff]
    %v52 = vld [vmem:[#allocation2 + $0xb8] sm:$0xff]
    %v53 = vld [vmem:[#allocation2 + $0xc0] sm:$0xff]
    %v54 = vld [vmem:[#allocation2 + $0xc8] sm:$0xff]
    %v55 = vld [vmem:[#allocation2 + $0xd0] sm:$0xff]
    %v56 = vld [vmem:[#allocation2 + $0xd8] sm:$0xff]
    %v57 = vld [vmem:[#allocation2 + $0xe0] sm:$0xff]
    %v58 = vld [vmem:[#allocation2 + $0xe8] sm:$0xff]
    %v59 = vld [vmem:[#allocation2 + $0xf0] sm:$0xff]
    %v60 = vld [vmem:[#allocation2 + $0xf8] sm:$0xff]
    %v61 = vld [vmem:[#allocation2 + $0x100] sm:$0xff]
    %v62 = vld [vmem:[#allocation2 + $0x108] sm:$0xff]
    %v63 = vld [vmem:[%s2] ss:$4 sm:$0x3]
    %s64 = scalar_lea.vmem %s2, 1
    %v65 = vld [vmem:[%s64] ss:$4 sm:$0x3]
    %v67 = vlaneseq
    %v68 = vshrl.u32 %v67, 7
    %v69 = vsub.s32 0, %v68
    %v70 = vrot.slane %v65, %v69
    %v71 = vlaneseq
    %v72 = vshrl.u32 %v71, 7
    %v73 = vsub.s32 1, %v72
    %v74 = vrot.slane %v65, %v73
    %s77 = scalar_lea.vmem %s2, 2
    %v78 = vld [vmem:[%s77] ss:$4 sm:$0x3]
    %s79 = scalar_lea.vmem %s2, 3
    %v80 = vld [vmem:[%s79] ss:$4 sm:$0x3]
    %v81 = vld [vmem:[%s0] sm:$0xff]
    %v82 = vld [vmem:[%s0 + $0x8] sm:$0xff]
    %v83 = vld [vmem:[%s0 + $0x10] sm:$0xff]
    %v84 = vld [vmem:[%s0 + $0x18] sm:$0xff]
    %v85 = vld [vmem:[%s0 + $0x20] sm:$0xff]
    %v86 = vld [vmem:[%s0 + $0x28] sm:$0xff]
    %v87 = vld [vmem:[%s0 + $0x30] sm:$0xff]
    %v88 = vld [vmem:[%s0 + $0x38] sm:$0xff]
    %v90 = vlaneseq
    %v91 = vshrl.u32 %v90, 7
    %v92 = vsub.s32 0, %v91
    %v93 = vrot.slane %v63, %v92
    %v94 = vlaneseq
    %v95 = vshrl.u32 %v94, 7
    %v96 = vsub.s32 1, %v95
    %v97 = vrot.slane %v63, %v96
    %vm100 = vcmask 31744
    %v102 = vsel %vm100, %v81, 0
    %v105 = vsel %vm100, %v82, 0
    %v108 = vsel %vm100, %v83, 0
    %v111 = vsel %vm100, %v84, 0
    %v114 = vsel %vm100, %v85, 0
    %v117 = vsel %vm100, %v86, 0
    %v120 = vsel %vm100, %v87, 0
    %v123 = vsel %vm100, %v88, 0
    %vm125 = vcmask 1043456
    %v127 = vsel %vm125, %v29, 0
    %v130 = vsel %vm125, %v30, 0
    %132 = vmatprep.subr.mxu0 %v130
    %133 = vmatpush1.msra.mxu0 %v127
    %134 = vmatprep.subr.mxu0 0.0
    %135 = vmatpush1.msra.mxu0 0.0
    %136 = vmatprep.subr.mxu0 0.0
    %137 = vmatpush1.msra.mxu0 0.0
    %138 = vmatprep.subr.mxu0 0.0
    %139 = vmatpush1.msra.mxu0 0.0
    %140 = vmatprep.subr.mxu0 0.0
    %141 = vmatpush1.msra.mxu0 0.0
    %142 = vmatprep.subr.mxu0 0.0
    %143 = vmatpush1.msra.mxu0 0.0
    %144 = vmatprep.subr.mxu0 0.0
    %145 = vmatpush1.msra.mxu0 0.0
    %146 = vmatprep.subr.mxu0 0.0
    %147 = vmatpush1.msra.mxu0 0.0
    %148 = vmatprep.subr.mxu0 0.0
    %149 = vmatpush1.msra.mxu0 0.0
    %150 = vmatprep.subr.mxu0 0.0
    %151 = vmatpush1.msra.mxu0 0.0
    %152 = vmatprep.subr.mxu0 0.0
    %153 = vmatpush1.msra.mxu0 0.0
    %154 = vmatprep.subr.mxu0 0.0
    %155 = vmatpush1.msra.mxu0 0.0
    %156 = vmatprep.subr.mxu0 0.0
    %157 = vmatpush1.msra.mxu0 0.0
    %158 = vmatprep.subr.mxu0 0.0
    %159 = vmatpush1.msra.mxu0 0.0
    %160 = vmatprep.subr.mxu0 0.0
    %161 = vmatpush1.msra.mxu0 0.0
    %162 = vmatprep.subr.mxu0 0.0
    %163 = vmatpush1.msra.mxu0 0.0
    %164 = vmatprep.subr.mxu0 0.0
    %165 = vmatpush1.msra.mxu0 0.0
    %166 = vmatprep.subr.mxu0 0.0
    %167 = vmatpush1.msra.mxu0 0.0
    %168 = vmatprep.subr.mxu0 0.0
    %169 = vmatpush1.msra.mxu0 0.0
    %170 = vmatprep.subr.mxu0 0.0
    %171 = vmatpush1.msra.mxu0 0.0
    %172 = vmatprep.subr.mxu0 0.0
    %173 = vmatpush1.msra.mxu0 0.0
    %174 = vmatprep.subr.mxu0 0.0
    %175 = vmatpush1.msra.mxu0 0.0
    %176 = vmatprep.subr.mxu0 0.0
    %177 = vmatpush1.msra.mxu0 0.0
    %178 = vmatprep.subr.mxu0 0.0
    %179 = vmatpush1.msra.mxu0 0.0
    %180 = vmatprep.subr.mxu0 0.0
    %181 = vmatpush1.msra.mxu0 0.0
    %182 = vmatprep.subr.mxu0 0.0
    %183 = vmatpush1.msra.mxu0 0.0
    %184 = vmatprep.subr.mxu0 0.0
    %185 = vmatpush1.msra.mxu0 0.0
    %186 = vmatprep.subr.mxu0 0.0
    %187 = vmatpush1.msra.mxu0 0.0
    %188 = vmatprep.subr.mxu0 0.0
    %189 = vmatpush1.msra.mxu0 0.0
    %190 = vmatprep.subr.mxu0 0.0
    %191 = vmatpush1.msra.mxu0 0.0
    %192 = vmatprep.subr.mxu0 0.0
    %193 = vmatpush1.msra.mxu0 0.0
    %194 = vmatprep.subr.mxu0 0.0
    %195 = vmatpush1.msra.mxu0 0.0
    %196 = vmatprep.mubr.f32.mxu0 0.0
    %197 = vmatmul.mubr.f32.gmra.mrb[0].mxu0 %v102
    %v198 = vpop.f32.mrb[0].mxu0
    %v199 = vadd.f32 %v93, %v198
    %v200 = vpop.f32.mrb[0].mxu0
    %v201 = vadd.f32 %v97, %v200
    %202 = vmatprep.mubr.f32.mxu0 0.0
    %203 = vmatmul.mubr.f32.gmra.mrb[0].mxu0 %v105
    %v204 = vpop.f32.mrb[0].mxu0
    %v205 = vadd.f32 %v93, %v204
    %v206 = vpop.f32.mrb[0].mxu0
    %v207 = vadd.f32 %v97, %v206
    %208 = vmatprep.mubr.f32.mxu0 0.0
    %209 = vmatmul.mubr.f32.gmra.mrb[0].mxu0 %v108
    %v210 = vpop.f32.mrb[0].mxu0
    %v211 = vadd.f32 %v93, %v210
    %v212 = vpop.f32.mrb[0].mxu0
    %v213 = vadd.f32 %v97, %v212
    %214 = vmatprep.mubr.f32.mxu0 0.0
    %215 = vmatmul.mubr.f32.gmra.mrb[0].mxu0 %v111
    %v216 = vpop.f32.mrb[0].mxu0
    %v217 = vadd.f32 %v93, %v216
    %v218 = vpop.f32.mrb[0].mxu0
    %v219 = vadd.f32 %v97, %v218
    %220 = vmatprep.mubr.f32.mxu0 0.0
    %221 = vmatmul.mubr.f32.gmra.mrb[0].mxu0 %v114
    %v222 = vpop.f32.mrb[0].mxu0
    %v223 = vadd.f32 %v93, %v222
    %v224 = vpop.f32.mrb[0].mxu0
    %v225 = vadd.f32 %v97, %v224
    %226 = vmatprep.mubr.f32.mxu0 0.0
    %227 = vmatmul.mubr.f32.gmra.mrb[0].mxu0 %v117
    %v228 = vpop.f32.mrb[0].mxu0
    %v229 = vadd.f32 %v93, %v228
    %v230 = vpop.f32.mrb[0].mxu0
    %v231 = vadd.f32 %v97, %v230
    %232 = vmatprep.mubr.f32.mxu0 0.0
    %233 = vmatmul.mubr.f32.gmra.mrb[0].mxu0 %v120
    %v234 = vpop.f32.mrb[0].mxu0
    %v235 = vadd.f32 %v93, %v234
    %v236 = vpop.f32.mrb[0].mxu0
    %v237 = vadd.f32 %v97, %v236
    %238 = vmatprep.mubr.f32.mxu0 0.0
    %239 = vmatmul.mubr.f32.gmra.mrb[0].mxu0 %v123
    %v240 = vpop.f32.mrb[0].mxu0
    %v241 = vadd.f32 %v93, %v240
    %v242 = vpop.f32.mrb[0].mxu0
    %v243 = vadd.f32 %v97, %v242
    %244 = vdwg.mxu0
    %v246 = vlaneseq
    %v247 = vshrl.u32 %v246, 7
    %v248 = vsub.s32 0, %v247
    %v249 = vrot.slane %v78, %v248
    %v250 = vlaneseq
    %v251 = vshrl.u32 %v250, 7
    %v252 = vsub.s32 1, %v251
    %v253 = vrot.slane %v78, %v252
    %v256 = vmul.f32 %v199, %v249
    %v257 = vmul.f32 %v201, %v253
    %v258 = vmul.f32 %v256, %v70
    %v259 = vmul.f32 %v257, %v74
    %v260 = vtanh.pop %v258
    %v261 = vtanh.pop %v259
    %v262 = vmul.f32 %v260, 0.5
    %v263 = vmul.f32 %v261, 0.5
    %v264 = vadd.f32 %v262, 0.5
    %v265 = vadd.f32 %v263, 0.5
    %v266 = vmul.f32 %v264, 0.0
    %v267 = vmul.f32 %v264, %v261
    %269 = vrot.lane.b32.xlu0 %v267, 64
    %v270 = vpop.permute.xlu0 %269
    %v272 = vadd.f32 %v266, %v270
    %v273 = vtanh.pop %v272
    %v274 = vmul.f32 %v265, %v273
    %276 = vrot.lane.b32.xlu0 %v274, 64
    %v277 = vpop.permute.xlu0 %276
    %vm278 = vcmask 523264
    %v279 = vsel %vm278, %v277, 0
    %281 = vmatprep.subr.mxu0 %v32
    %282 = vmatpush1.msra.mxu0 %v31
    %283 = vmatprep.subr.mxu0 %v34
    %284 = vmatpush1.msra.mxu0 %v33
    %285 = vmatprep.subr.mxu0 %v36
    %286 = vmatpush1.msra.mxu0 %v35
    %287 = vmatprep.subr.mxu0 %v38
    %288 = vmatpush1.msra.mxu0 %v37
    %289 = vmatprep.subr.mxu0 %v40
    %290 = vmatpush1.msra.mxu0 %v39
    %291 = vmatprep.subr.mxu0 %v42
    %292 = vmatpush1.msra.mxu0 %v41
    %293 = vmatprep.subr.mxu0 %v44
    %294 = vmatpush1.msra.mxu0 %v43
    %295 = vmatprep.subr.mxu0 %v46
    %296 = vmatpush1.msra.mxu0 %v45
    %297 = vmatprep.subr.mxu0 0.0
    %298 = vmatpush1.msra.mxu0 0.0
    %299 = vmatprep.subr.mxu0 0.0
    %300 = vmatpush1.msra.mxu0 0.0
    %301 = vmatprep.subr.mxu0 0.0
    %302 = vmatpush1.msra.mxu0 0.0
    %303 = vmatprep.subr.mxu0 0.0
    %304 = vmatpush1.msra.mxu0 0.0
    %305 = vmatprep.subr.mxu0 0.0
    %306 = vmatpush1.msra.mxu0 0.0
    %307 = vmatprep.subr.mxu0 0.0
    %308 = vmatpush1.msra.mxu0 0.0
    %309 = vmatprep.subr.mxu0 0.0
    %310 = vmatpush1.msra.mxu0 0.0
    %311 = vmatprep.subr.mxu0 0.0
    %312 = vmatpush1.msra.mxu0 0.0
    %313 = vmatprep.subr.mxu0 0.0
    %314 = vmatpush1.msra.mxu0 0.0
    %315 = vmatprep.subr.mxu0 0.0
    %316 = vmatpush1.msra.mxu0 0.0
    %317 = vmatprep.subr.mxu0 0.0
    %318 = vmatpush1.msra.mxu0 0.0
    %319 = vmatprep.subr.mxu0 0.0
    %320 = vmatpush1.msra.mxu0 0.0
    %321 = vmatprep.subr.mxu0 0.0
    %322 = vmatpush1.msra.mxu0 0.0
    %323 = vmatprep.subr.mxu0 0.0
    %324 = vmatpush1.msra.mxu0 0.0
    %325 = vmatprep.subr.mxu0 0.0
    %326 = vmatpush1.msra.mxu0 0.0
    %327 = vmatprep.subr.mxu0 0.0
    %328 = vmatpush1.msra.mxu0 0.0
    %329 = vmatprep.subr.mxu0 0.0
    %330 = vmatpush1.msra.mxu0 0.0
    %331 = vmatprep.subr.mxu0 0.0
    %332 = vmatpush1.msra.mxu0 0.0
    %333 = vmatprep.subr.mxu0 0.0
    %334 = vmatpush1.msra.mxu0 0.0
    %335 = vmatprep.subr.mxu0 0.0
    %336 = vmatpush1.msra.mxu0 0.0
    %337 = vmatprep.subr.mxu0 0.0
    %338 = vmatpush1.msra.mxu0 0.0
    %339 = vmatprep.subr.mxu0 0.0
    %340 = vmatpush1.msra.mxu0 0.0
    %341 = vmatprep.subr.mxu0 0.0
    %342 = vmatpush1.msra.mxu0 0.0
    %343 = vmatprep.subr.mxu0 0.0
    %344 = vmatpush1.msra.mxu0 0.0
    %345 = vmatprep.mubr.f32.mxu0 0.0
    %346 = vmatmul.mubr.f32.gmra.mrb[0].mxu0 %v279
    %v347 = vpop.f32.mrb[0].mxu0
    %v348 = vadd.f32 %v205, %v347
    %v349 = vpop.f32.mrb[0].mxu0
    %v350 = vadd.f32 %v207, %v349
    %351 = vdwg.mxu0
    %v352 = vmul.f32 %v348, %v70
    %v353 = vmul.f32 %v350, %v74
    %v354 = vtanh.pop %v352
    %v355 = vtanh.pop %v353
    %v356 = vmul.f32 %v354, 0.5
    %v357 = vmul.f32 %v355, 0.5
    %v358 = vadd.f32 %v356, 0.5
    %v359 = vadd.f32 %v357, 0.5
    %v360 = vmul.f32 %v358, %v272
    %v361 = vmul.f32 %v358, %v355
    %363 = vrot.lane.b32.xlu0 %v361, 64
    %v364 = vpop.permute.xlu0 %363
    %v366 = vadd.f32 %v360, %v364
    %v367 = vtanh.pop %v366
    %v368 = vmul.f32 %v359, %v367
    %370 = vrot.lane.b32.xlu0 %v368, 64
    %v371 = vpop.permute.xlu0 %370
    %v372 = vsel %vm278, %v371, 0
    %374 = vmatprep.subr.mxu0 %v32
    %375 = vmatpush1.msra.mxu0 %v31
    %376 = vmatprep.subr.mxu0 %v34
    %377 = vmatpush1.msra.mxu0 %v33
    %378 = vmatprep.subr.mxu0 %v36
    %379 = vmatpush1.msra.mxu0 %v35
    %380 = vmatprep.subr.mxu0 %v38
    %381 = vmatpush1.msra.mxu0 %v37
    %382 = vmatprep.subr.mxu0 %v40
    %383 = vmatpush1.msra.mxu0 %v39
    %384 = vmatprep.subr.mxu0 %v42
    %385 = vmatpush1.msra.mxu0 %v41
    %386 = vmatprep.subr.mxu0 %v44
    %387 = vmatpush1.msra.mxu0 %v43
    %388 = vmatprep.subr.mxu0 %v46
    %389 = vmatpush1.msra.mxu0 %v45
    %390 = vmatprep.subr.mxu0 0.0
    %391 = vmatpush1.msra.mxu0 0.0
    %392 = vmatprep.subr.mxu0 0.0
    %393 = vmatpush1.msra.mxu0 0.0
    %394 = vmatprep.subr.mxu0 0.0
    %395 = vmatpush1.msra.mxu0 0.0
    %396 = vmatprep.subr.mxu0 0.0
    %397 = vmatpush1.msra.mxu0 0.0
    %398 = vmatprep.subr.mxu0 0.0
    %399 = vmatpush1.msra.mxu0 0.0
    %400 = vmatprep.subr.mxu0 0.0
    %401 = vmatpush1.msra.mxu0 0.0
    %402 = vmatprep.subr.mxu0 0.0
    %403 = vmatpush1.msra.mxu0 0.0
    %404 = vmatprep.subr.mxu0 0.0
    %405 = vmatpush1.msra.mxu0 0.0
    %406 = vmatprep.subr.mxu0 0.0
    %407 = vmatpush1.msra.mxu0 0.0
    %408 = vmatprep.subr.mxu0 0.0
    %409 = vmatpush1.msra.mxu0 0.0
    %410 = vmatprep.subr.mxu0 0.0
    %411 = vmatpush1.msra.mxu0 0.0
    %412 = vmatprep.subr.mxu0 0.0
    %413 = vmatpush1.msra.mxu0 0.0
    %414 = vmatprep.subr.mxu0 0.0
    %415 = vmatpush1.msra.mxu0 0.0
    %416 = vmatprep.subr.mxu0 0.0
    %417 = vmatpush1.msra.mxu0 0.0
    %418 = vmatprep.subr.mxu0 0.0
    %419 = vmatpush1.msra.mxu0 0.0
    %420 = vmatprep.subr.mxu0 0.0
    %421 = vmatpush1.msra.mxu0 0.0
    %422 = vmatprep.subr.mxu0 0.0
    %423 = vmatpush1.msra.mxu0 0.0
    %424 = vmatprep.subr.mxu0 0.0
    %425 = vmatpush1.msra.mxu0 0.0
    %426 = vmatprep.subr.mxu0 0.0
    %427 = vmatpush1.msra.mxu0 0.0
    %428 = vmatprep.subr.mxu0 0.0
    %429 = vmatpush1.msra.mxu0 0.0
    %430 = vmatprep.subr.mxu0 0.0
    %431 = vmatpush1.msra.mxu0 0.0
    %432 = vmatprep.subr.mxu0 0.0
    %433 = vmatpush1.msra.mxu0 0.0
    %434 = vmatprep.subr.mxu0 0.0
    %435 = vmatpush1.msra.mxu0 0.0
    %436 = vmatprep.subr.mxu0 0.0
    %437 = vmatpush1.msra.mxu0 0.0
    %438 = vmatprep.mubr.f32.mxu0 0.0
    %439 = vmatmul.mubr.f32.gmra.mrb[0].mxu0 %v372
    %v440 = vpop.f32.mrb[0].mxu0
    %v441 = vadd.f32 %v211, %v440
    %v442 = vpop.f32.mrb[0].mxu0
    %v443 = vadd.f32 %v213, %v442
    %444 = vdwg.mxu0
    %v445 = vmul.f32 %v441, %v70
    %v446 = vmul.f32 %v443, %v74
    %v447 = vtanh.pop %v445
    %v448 = vtanh.pop %v446
    %v449 = vmul.f32 %v447, 0.5
    %v450 = vmul.f32 %v448, 0.5
    %v451 = vadd.f32 %v449, 0.5
    %v452 = vadd.f32 %v450, 0.5
    %v453 = vmul.f32 %v451, %v366
    %v454 = vmul.f32 %v451, %v448
    %456 = vrot.lane.b32.xlu0 %v454, 64
    %v457 = vpop.permute.xlu0 %456
    %v459 = vadd.f32 %v453, %v457
    %v460 = vtanh.pop %v459
    %v461 = vmul.f32 %v452, %v460
    %463 = vrot.lane.b32.xlu0 %v461, 64
    %v464 = vpop.permute.xlu0 %463
    %v465 = vsel %vm278, %v464, 0
    %467 = vmatprep.subr.mxu0 %v32
    %468 = vmatpush1.msra.mxu0 %v31
    %469 = vmatprep.subr.mxu0 %v34
    %470 = vmatpush1.msra.mxu0 %v33
    %471 = vmatprep.subr.mxu0 %v36
    %472 = vmatpush1.msra.mxu0 %v35
    %473 = vmatprep.subr.mxu0 %v38
    %474 = vmatpush1.msra.mxu0 %v37
    %475 = vmatprep.subr.mxu0 %v40
    %476 = vmatpush1.msra.mxu0 %v39
    %477 = vmatprep.subr.mxu0 %v42
    %478 = vmatpush1.msra.mxu0 %v41
    %479 = vmatprep.subr.mxu0 %v44
    %480 = vmatpush1.msra.mxu0 %v43
    %481 = vmatprep.subr.mxu0 %v46
    %482 = vmatpush1.msra.mxu0 %v45
    %483 = vmatprep.subr.mxu0 0.0
    %484 = vmatpush1.msra.mxu0 0.0
    %485 = vmatprep.subr.mxu0 0.0
    %486 = vmatpush1.msra.mxu0 0.0
    %487 = vmatprep.subr.mxu0 0.0
    %488 = vmatpush1.msra.mxu0 0.0
    %489 = vmatprep.subr.mxu0 0.0
    %490 = vmatpush1.msra.mxu0 0.0
    %491 = vmatprep.subr.mxu0 0.0
    %492 = vmatpush1.msra.mxu0 0.0
    %493 = vmatprep.subr.mxu0 0.0
    %494 = vmatpush1.msra.mxu0 0.0
    %495 = vmatprep.subr.mxu0 0.0
    %496 = vmatpush1.msra.mxu0 0.0
    %497 = vmatprep.subr.mxu0 0.0
    %498 = vmatpush1.msra.mxu0 0.0
    %499 = vmatprep.subr.mxu0 0.0
    %500 = vmatpush1.msra.mxu0 0.0
    %501 = vmatprep.subr.mxu0 0.0
    %502 = vmatpush1.msra.mxu0 0.0
    %503 = vmatprep.subr.mxu0 0.0
    %504 = vmatpush1.msra.mxu0 0.0
    %505 = vmatprep.subr.mxu0 0.0
    %506 = vmatpush1.msra.mxu0 0.0
    %507 = vmatprep.subr.mxu0 0.0
    %508 = vmatpush1.msra.mxu0 0.0
    %509 = vmatprep.subr.mxu0 0.0
    %510 = vmatpush1.msra.mxu0 0.0
    %511 = vmatprep.subr.mxu0 0.0
    %512 = vmatpush1.msra.mxu0 0.0
    %513 = vmatprep.subr.mxu0 0.0
    %514 = vmatpush1.msra.mxu0 0.0
    %515 = vmatprep.subr.mxu0 0.0
    %516 = vmatpush1.msra.mxu0 0.0
    %517 = vmatprep.subr.mxu0 0.0
    %518 = vmatpush1.msra.mxu0 0.0
    %519 = vmatprep.subr.mxu0 0.0
    %520 = vmatpush1.msra.mxu0 0.0
    %521 = vmatprep.subr.mxu0 0.0
    %522 = vmatpush1.msra.mxu0 0.0
    %523 = vmatprep.subr.mxu0 0.0
    %524 = vmatpush1.msra.mxu0 0.0
    %525 = vmatprep.subr.mxu0 0.0
    %526 = vmatpush1.msra.mxu0 0.0
    %527 = vmatprep.subr.mxu0 0.0
    %528 = vmatpush1.msra.mxu0 0.0
    %529 = vmatprep.subr.mxu0 0.0
    %530 = vmatpush1.msra.mxu0 0.0
    %531 = vmatprep.mubr.f32.mxu0 0.0
    %532 = vmatmul.mubr.f32.gmra.mrb[0].mxu0 %v465
    %v533 = vpop.f32.mrb[0].mxu0
    %v534 = vadd.f32 %v217, %v533
    %v535 = vpop.f32.mrb[0].mxu0
    %v536 = vadd.f32 %v219, %v535
    %537 = vdwg.mxu0
    %v538 = vmul.f32 %v534, %v70
    %v539 = vmul.f32 %v536, %v74
    %v540 = vtanh.pop %v538
    %v541 = vtanh.pop %v539
    %v542 = vmul.f32 %v540, 0.5
    %v543 = vmul.f32 %v541, 0.5
    %v544 = vadd.f32 %v542, 0.5
    %v545 = vadd.f32 %v543, 0.5
    %v546 = vmul.f32 %v544, %v459
    %v547 = vmul.f32 %v544, %v541
    %549 = vrot.lane.b32.xlu0 %v547, 64
    %v550 = vpop.permute.xlu0 %549
    %v552 = vadd.f32 %v546, %v550
    %v553 = vtanh.pop %v552
    %v554 = vmul.f32 %v545, %v553
    %556 = vrot.lane.b32.xlu0 %v554, 64
    %v557 = vpop.permute.xlu0 %556
    %v558 = vsel %vm278, %v557, 0
    %560 = vmatprep.subr.mxu0 %v32
    %561 = vmatpush1.msra.mxu0 %v31
    %562 = vmatprep.subr.mxu0 %v34
    %563 = vmatpush1.msra.mxu0 %v33
    %564 = vmatprep.subr.mxu0 %v36
    %565 = vmatpush1.msra.mxu0 %v35
    %566 = vmatprep.subr.mxu0 %v38
    %567 = vmatpush1.msra.mxu0 %v37
    %568 = vmatprep.subr.mxu0 %v40
    %569 = vmatpush1.msra.mxu0 %v39
    %570 = vmatprep.subr.mxu0 %v42
    %571 = vmatpush1.msra.mxu0 %v41
    %572 = vmatprep.subr.mxu0 %v44
    %573 = vmatpush1.msra.mxu0 %v43
    %574 = vmatprep.subr.mxu0 %v46
    %575 = vmatpush1.msra.mxu0 %v45
    %576 = vmatprep.subr.mxu0 0.0
    %577 = vmatpush1.msra.mxu0 0.0
    %578 = vmatprep.subr.mxu0 0.0
    %579 = vmatpush1.msra.mxu0 0.0
    %580 = vmatprep.subr.mxu0 0.0
    %581 = vmatpush1.msra.mxu0 0.0
    %582 = vmatprep.subr.mxu0 0.0
    %583 = vmatpush1.msra.mxu0 0.0
    %584 = vmatprep.subr.mxu0 0.0
    %585 = vmatpush1.msra.mxu0 0.0
    %586 = vmatprep.subr.mxu0 0.0
    %587 = vmatpush1.msra.mxu0 0.0
    %588 = vmatprep.subr.mxu0 0.0
    %589 = vmatpush1.msra.mxu0 0.0
    %590 = vmatprep.subr.mxu0 0.0
    %591 = vmatpush1.msra.mxu0 0.0
    %592 = vmatprep.subr.mxu0 0.0
    %593 = vmatpush1.msra.mxu0 0.0
    %594 = vmatprep.subr.mxu0 0.0
    %595 = vmatpush1.msra.mxu0 0.0
    %596 = vmatprep.subr.mxu0 0.0
    %597 = vmatpush1.msra.mxu0 0.0
    %598 = vmatprep.subr.mxu0 0.0
    %599 = vmatpush1.msra.mxu0 0.0
    %600 = vmatprep.subr.mxu0 0.0
    %601 = vmatpush1.msra.mxu0 0.0
    %602 = vmatprep.subr.mxu0 0.0
    %603 = vmatpush1.msra.mxu0 0.0
    %604 = vmatprep.subr.mxu0 0.0
    %605 = vmatpush1.msra.mxu0 0.0
    %606 = vmatprep.subr.mxu0 0.0
    %607 = vmatpush1.msra.mxu0 0.0
    %608 = vmatprep.subr.mxu0 0.0
    %609 = vmatpush1.msra.mxu0 0.0
    %610 = vmatprep.subr.mxu0 0.0
    %611 = vmatpush1.msra.mxu0 0.0
    %612 = vmatprep.subr.mxu0 0.0
    %613 = vmatpush1.msra.mxu0 0.0
    %614 = vmatprep.subr.mxu0 0.0
    %615 = vmatpush1.msra.mxu0 0.0
    %616 = vmatprep.subr.mxu0 0.0
    %617 = vmatpush1.msra.mxu0 0.0
    %618 = vmatprep.subr.mxu0 0.0
    %619 = vmatpush1.msra.mxu0 0.0
    %620 = vmatprep.subr.mxu0 0.0
    %621 = vmatpush1.msra.mxu0 0.0
    %622 = vmatprep.subr.mxu0 0.0
    %623 = vmatpush1.msra.mxu0 0.0
    %624 = vmatprep.mubr.f32.mxu0 0.0
    %625 = vmatmul.mubr.f32.gmra.mrb[0].mxu0 %v558
    %v626 = vpop.f32.mrb[0].mxu0
    %v627 = vadd.f32 %v223, %v626
    %v628 = vpop.f32.mrb[0].mxu0
    %v629 = vadd.f32 %v225, %v628
    %630 = vdwg.mxu0
    %v631 = vmul.f32 %v627, %v70
    %v632 = vmul.f32 %v629, %v74
    %v633 = vtanh.pop %v631
    %v634 = vtanh.pop %v632
    %v635 = vmul.f32 %v633, 0.5
    %v636 = vmul.f32 %v634, 0.5
    %v637 = vadd.f32 %v635, 0.5
    %v638 = vadd.f32 %v636, 0.5
    %v639 = vmul.f32 %v637, %v552
    %v640 = vmul.f32 %v637, %v634
    %642 = vrot.lane.b32.xlu0 %v640, 64
    %v643 = vpop.permute.xlu0 %642
    %v645 = vadd.f32 %v639, %v643
    %v646 = vtanh.pop %v645
    %v647 = vmul.f32 %v638, %v646
    %649 = vrot.lane.b32.xlu0 %v647, 64
    %v650 = vpop.permute.xlu0 %649
    %v651 = vsel %vm278, %v650, 0
    %653 = vmatprep.subr.mxu0 %v32
    %654 = vmatpush1.msra.mxu0 %v31
    %655 = vmatprep.subr.mxu0 %v34
    %656 = vmatpush1.msra.mxu0 %v33
    %657 = vmatprep.subr.mxu0 %v36
    %658 = vmatpush1.msra.mxu0 %v35
    %659 = vmatprep.subr.mxu0 %v38
    %660 = vmatpush1.msra.mxu0 %v37
    %661 = vmatprep.subr.mxu0 %v40
    %662 = vmatpush1.msra.mxu0 %v39
    %663 = vmatprep.subr.mxu0 %v42
    %664 = vmatpush1.msra.mxu0 %v41
    %665 = vmatprep.subr.mxu0 %v44
    %666 = vmatpush1.msra.mxu0 %v43
    %667 = vmatprep.subr.mxu0 %v46
    %668 = vmatpush1.msra.mxu0 %v45
    %669 = vmatprep.subr.mxu0 0.0
    %670 = vmatpush1.msra.mxu0 0.0
    %671 = vmatprep.subr.mxu0 0.0
    %672 = vmatpush1.msra.mxu0 0.0
    %673 = vmatprep.subr.mxu0 0.0
    %674 = vmatpush1.msra.mxu0 0.0
    %675 = vmatprep.subr.mxu0 0.0
    %676 = vmatpush1.msra.mxu0 0.0
    %677 = vmatprep.subr.mxu0 0.0
    %678 = vmatpush1.msra.mxu0 0.0
    %679 = vmatprep.subr.mxu0 0.0
    %680 = vmatpush1.msra.mxu0 0.0
    %681 = vmatprep.subr.mxu0 0.0
    %682 = vmatpush1.msra.mxu0 0.0
    %683 = vmatprep.subr.mxu0 0.0
    %684 = vmatpush1.msra.mxu0 0.0
    %685 = vmatprep.subr.mxu0 0.0
    %686 = vmatpush1.msra.mxu0 0.0
    %687 = vmatprep.subr.mxu0 0.0
    %688 = vmatpush1.msra.mxu0 0.0
    %689 = vmatprep.subr.mxu0 0.0
    %690 = vmatpush1.msra.mxu0 0.0
    %691 = vmatprep.subr.mxu0 0.0
    %692 = vmatpush1.msra.mxu0 0.0
    %693 = vmatprep.subr.mxu0 0.0
    %694 = vmatpush1.msra.mxu0 0.0
    %695 = vmatprep.subr.mxu0 0.0
    %696 = vmatpush1.msra.mxu0 0.0
    %697 = vmatprep.subr.mxu0 0.0
    %698 = vmatpush1.msra.mxu0 0.0
    %699 = vmatprep.subr.mxu0 0.0
    %700 = vmatpush1.msra.mxu0 0.0
    %701 = vmatprep.subr.mxu0 0.0
    %702 = vmatpush1.msra.mxu0 0.0
    %703 = vmatprep.subr.mxu0 0.0
    %704 = vmatpush1.msra.mxu0 0.0
    %705 = vmatprep.subr.mxu0 0.0
    %706 = vmatpush1.msra.mxu0 0.0
    %707 = vmatprep.subr.mxu0 0.0
    %708 = vmatpush1.msra.mxu0 0.0
    %709 = vmatprep.subr.mxu0 0.0
    %710 = vmatpush1.msra.mxu0 0.0
    %711 = vmatprep.subr.mxu0 0.0
    %712 = vmatpush1.msra.mxu0 0.0
    %713 = vmatprep.subr.mxu0 0.0
    %714 = vmatpush1.msra.mxu0 0.0
    %715 = vmatprep.subr.mxu0 0.0
    %716 = vmatpush1.msra.mxu0 0.0
    %717 = vmatprep.mubr.f32.mxu0 0.0
    %718 = vmatmul.mubr.f32.gmra.mrb[0].mxu0 %v651
    %v719 = vpop.f32.mrb[0].mxu0
    %v720 = vadd.f32 %v229, %v719
    %v721 = vpop.f32.mrb[0].mxu0
    %v722 = vadd.f32 %v231, %v721
    %723 = vdwg.mxu0
    %v724 = vmul.f32 %v720, %v70
    %v725 = vmul.f32 %v722, %v74
    %v726 = vtanh.pop %v724
    %v727 = vtanh.pop %v725
    %v728 = vmul.f32 %v726, 0.5
    %v729 = vmul.f32 %v727, 0.5
    %v730 = vadd.f32 %v728, 0.5
    %v731 = vadd.f32 %v729, 0.5
    %v732 = vmul.f32 %v730, %v645
    %v733 = vmul.f32 %v730, %v727
    %735 = vrot.lane.b32.xlu0 %v733, 64
    %v736 = vpop.permute.xlu0 %735
    %v738 = vadd.f32 %v732, %v736
    %v739 = vtanh.pop %v738
    %v740 = vmul.f32 %v731, %v739
    %742 = vrot.lane.b32.xlu0 %v740, 64
    %v743 = vpop.permute.xlu0 %742
    %v744 = vsel %vm278, %v743, 0
    %746 = vmatprep.subr.mxu0 %v32
    %747 = vmatpush1.msra.mxu0 %v31
    %748 = vmatprep.subr.mxu0 %v34
    %749 = vmatpush1.msra.mxu0 %v33
    %750 = vmatprep.subr.mxu0 %v36
    %751 = vmatpush1.msra.mxu0 %v35
    %752 = vmatprep.subr.mxu0 %v38
    %753 = vmatpush1.msra.mxu0 %v37
    %754 = vmatprep.subr.mxu0 %v40
    %755 = vmatpush1.msra.mxu0 %v39
    %756 = vmatprep.subr.mxu0 %v42
    %757 = vmatpush1.msra.mxu0 %v41
    %758 = vmatprep.subr.mxu0 %v44
    %759 = vmatpush1.msra.mxu0 %v43
    %760 = vmatprep.subr.mxu0 %v46
    %761 = vmatpush1.msra.mxu0 %v45
    %762 = vmatprep.subr.mxu0 0.0
    %763 = vmatpush1.msra.mxu0 0.0
    %764 = vmatprep.subr.mxu0 0.0
    %765 = vmatpush1.msra.mxu0 0.0
    %766 = vmatprep.subr.mxu0 0.0
    %767 = vmatpush1.msra.mxu0 0.0
    %768 = vmatprep.subr.mxu0 0.0
    %769 = vmatpush1.msra.mxu0 0.0
    %770 = vmatprep.subr.mxu0 0.0
    %771 = vmatpush1.msra.mxu0 0.0
    %772 = vmatprep.subr.mxu0 0.0
    %773 = vmatpush1.msra.mxu0 0.0
    %774 = vmatprep.subr.mxu0 0.0
    %775 = vmatpush1.msra.mxu0 0.0
    %776 = vmatprep.subr.mxu0 0.0
    %777 = vmatpush1.msra.mxu0 0.0
    %778 = vmatprep.subr.mxu0 0.0
    %779 = vmatpush1.msra.mxu0 0.0
    %780 = vmatprep.subr.mxu0 0.0
    %781 = vmatpush1.msra.mxu0 0.0
    %782 = vmatprep.subr.mxu0 0.0
    %783 = vmatpush1.msra.mxu0 0.0
    %784 = vmatprep.subr.mxu0 0.0
    %785 = vmatpush1.msra.mxu0 0.0
    %786 = vmatprep.subr.mxu0 0.0
    %787 = vmatpush1.msra.mxu0 0.0
    %788 = vmatprep.subr.mxu0 0.0
    %789 = vmatpush1.msra.mxu0 0.0
    %790 = vmatprep.subr.mxu0 0.0
    %791 = vmatpush1.msra.mxu0 0.0
    %792 = vmatprep.subr.mxu0 0.0
    %793 = vmatpush1.msra.mxu0 0.0
    %794 = vmatprep.subr.mxu0 0.0
    %795 = vmatpush1.msra.mxu0 0.0
    %796 = vmatprep.subr.mxu0 0.0
    %797 = vmatpush1.msra.mxu0 0.0
    %798 = vmatprep.subr.mxu0 0.0
    %799 = vmatpush1.msra.mxu0 0.0
    %800 = vmatprep.subr.mxu0 0.0
    %801 = vmatpush1.msra.mxu0 0.0
    %802 = vmatprep.subr.mxu0 0.0
    %803 = vmatpush1.msra.mxu0 0.0
    %804 = vmatprep.subr.mxu0 0.0
    %805 = vmatpush1.msra.mxu0 0.0
    %806 = vmatprep.subr.mxu0 0.0
    %807 = vmatpush1.msra.mxu0 0.0
    %808 = vmatprep.subr.mxu0 0.0
    %809 = vmatpush1.msra.mxu0 0.0
    %810 = vmatprep.mubr.f32.mxu0 0.0
    %811 = vmatmul.mubr.f32.gmra.mrb[0].mxu0 %v744
    %v812 = vpop.f32.mrb[0].mxu0
    %v813 = vadd.f32 %v235, %v812
    %v814 = vpop.f32.mrb[0].mxu0
    %v815 = vadd.f32 %v237, %v814
    %816 = vdwg.mxu0
    %v817 = vmul.f32 %v813, %v70
    %v818 = vmul.f32 %v815, %v74
    %v819 = vtanh.pop %v817
    %v820 = vtanh.pop %v818
    %v821 = vmul.f32 %v819, 0.5
    %v822 = vmul.f32 %v820, 0.5
    %v823 = vadd.f32 %v821, 0.5
    %v824 = vadd.f32 %v822, 0.5
    %v825 = vmul.f32 %v823, %v738
    %v826 = vmul.f32 %v823, %v820
    %828 = vrot.lane.b32.xlu0 %v826, 64
    %v829 = vpop.permute.xlu0 %828
    %v831 = vadd.f32 %v825, %v829
    %v832 = vtanh.pop %v831
    %v833 = vmul.f32 %v824, %v832
    %835 = vrot.lane.b32.xlu0 %v833, 64
    %v836 = vpop.permute.xlu0 %835
    %v837 = vsel %vm278, %v836, 0
    %839 = vmatprep.subr.mxu0 %v32
    %840 = vmatpush1.msra.mxu0 %v31
    %841 = vmatprep.subr.mxu0 %v34
    %842 = vmatpush1.msra.mxu0 %v33
    %843 = vmatprep.subr.mxu0 %v36
    %844 = vmatpush1.msra.mxu0 %v35
    %845 = vmatprep.subr.mxu0 %v38
    %846 = vmatpush1.msra.mxu0 %v37
    %847 = vmatprep.subr.mxu0 %v40
    %848 = vmatpush1.msra.mxu0 %v39
    %849 = vmatprep.subr.mxu0 %v42
    %850 = vmatpush1.msra.mxu0 %v41
    %851 = vmatprep.subr.mxu0 %v44
    %852 = vmatpush1.msra.mxu0 %v43
    %853 = vmatprep.subr.mxu0 %v46
    %854 = vmatpush1.msra.mxu0 %v45
    %855 = vmatprep.subr.mxu0 0.0
    %856 = vmatpush1.msra.mxu0 0.0
    %857 = vmatprep.subr.mxu0 0.0
    %858 = vmatpush1.msra.mxu0 0.0
    %859 = vmatprep.subr.mxu0 0.0
    %860 = vmatpush1.msra.mxu0 0.0
    %861 = vmatprep.subr.mxu0 0.0
    %862 = vmatpush1.msra.mxu0 0.0
    %863 = vmatprep.subr.mxu0 0.0
    %864 = vmatpush1.msra.mxu0 0.0
    %865 = vmatprep.subr.mxu0 0.0
    %866 = vmatpush1.msra.mxu0 0.0
    %867 = vmatprep.subr.mxu0 0.0
    %868 = vmatpush1.msra.mxu0 0.0
    %869 = vmatprep.subr.mxu0 0.0
    %870 = vmatpush1.msra.mxu0 0.0
    %871 = vmatprep.subr.mxu0 0.0
    %872 = vmatpush1.msra.mxu0 0.0
    %873 = vmatprep.subr.mxu0 0.0
    %874 = vmatpush1.msra.mxu0 0.0
    %875 = vmatprep.subr.mxu0 0.0
    %876 = vmatpush1.msra.mxu0 0.0
    %877 = vmatprep.subr.mxu0 0.0
    %878 = vmatpush1.msra.mxu0 0.0
    %879 = vmatprep.subr.mxu0 0.0
    %880 = vmatpush1.msra.mxu0 0.0
    %881 = vmatprep.subr.mxu0 0.0
    %882 = vmatpush1.msra.mxu0 0.0
    %883 = vmatprep.subr.mxu0 0.0
    %884 = vmatpush1.msra.mxu0 0.0
    %885 = vmatprep.subr.mxu0 0.0
    %886 = vmatpush1.msra.mxu0 0.0
    %887 = vmatprep.subr.mxu0 0.0
    %888 = vmatpush1.msra.mxu0 0.0
    %889 = vmatprep.subr.mxu0 0.0
    %890 = vmatpush1.msra.mxu0 0.0
    %891 = vmatprep.subr.mxu0 0.0
    %892 = vmatpush1.msra.mxu0 0.0
    %893 = vmatprep.subr.mxu0 0.0
    %894 = vmatpush1.msra.mxu0 0.0
    %895 = vmatprep.subr.mxu0 0.0
    %896 = vmatpush1.msra.mxu0 0.0
    %897 = vmatprep.subr.mxu0 0.0
    %898 = vmatpush1.msra.mxu0 0.0
    %899 = vmatprep.subr.mxu0 0.0
    %900 = vmatpush1.msra.mxu0 0.0
    %901 = vmatprep.subr.mxu0 0.0
    %902 = vmatpush1.msra.mxu0 0.0
    %903 = vmatprep.mubr.f32.mxu0 0.0
    %904 = vmatmul.mubr.f32.gmra.mrb[0].mxu0 %v837
    %v905 = vpop.f32.mrb[0].mxu0
    %v906 = vadd.f32 %v241, %v905
    %v907 = vpop.f32.mrb[0].mxu0
    %v908 = vadd.f32 %v243, %v907
    %909 = vdwg.mxu0
    %v910 = vmul.f32 %v906, %v70
    %v911 = vmul.f32 %v908, %v74
    %v912 = vtanh.pop %v910
    %v913 = vtanh.pop %v911
    %v914 = vmul.f32 %v912, 0.5
    %v915 = vmul.f32 %v913, 0.5
    %v916 = vadd.f32 %v914, 0.5
    %v917 = vadd.f32 %v915, 0.5
    %v918 = vmul.f32 %v916, %v831
    %v919 = vmul.f32 %v916, %v913
    %921 = vrot.lane.b32.xlu0 %v919, 64
    %v922 = vpop.permute.xlu0 %921
    %v924 = vadd.f32 %v918, %v922
    %v925 = vtanh.pop %v924
    %v926 = vmul.f32 %v917, %v925
    %928 = vrot.lane.b32.xlu0 %v926, 64
    %v929 = vpop.permute.xlu0 %928
    %v930 = vsel %vm278, %v929, 0
    %932 = vmatprep.subr.mxu0 %v32
    %933 = vmatpush1.msra.mxu0 %v31
    %934 = vmatprep.subr.mxu0 %v34
    %935 = vmatpush1.msra.mxu0 %v33
    %936 = vmatprep.subr.mxu0 %v36
    %937 = vmatpush1.msra.mxu0 %v35
    %938 = vmatprep.subr.mxu0 %v38
    %939 = vmatpush1.msra.mxu0 %v37
    %940 = vmatprep.subr.mxu0 %v40
    %941 = vmatpush1.msra.mxu0 %v39
    %942 = vmatprep.subr.mxu0 %v42
    %943 = vmatpush1.msra.mxu0 %v41
    %944 = vmatprep.subr.mxu0 %v44
    %945 = vmatpush1.msra.mxu0 %v43
    %946 = vmatprep.subr.mxu0 %v46
    %947 = vmatpush1.msra.mxu0 %v45
    %948 = vmatprep.subr.mxu0 0.0
    %949 = vmatpush1.msra.mxu0 0.0
    %950 = vmatprep.subr.mxu0 0.0
    %951 = vmatpush1.msra.mxu0 0.0
    %952 = vmatprep.subr.mxu0 0.0
    %953 = vmatpush1.msra.mxu0 0.0
    %954 = vmatprep.subr.mxu0 0.0
    %955 = vmatpush1.msra.mxu0 0.0
    %956 = vmatprep.subr.mxu0 0.0
    %957 = vmatpush1.msra.mxu0 0.0
    %958 = vmatprep.subr.mxu0 0.0
    %959 = vmatpush1.msra.mxu0 0.0
    %960 = vmatprep.subr.mxu0 0.0
    %961 = vmatpush1.msra.mxu0 0.0
    %962 = vmatprep.subr.mxu0 0.0
    %963 = vmatpush1.msra.mxu0 0.0
    %964 = vmatprep.subr.mxu0 0.0
    %965 = vmatpush1.msra.mxu0 0.0
    %966 = vmatprep.subr.mxu0 0.0
    %967 = vmatpush1.msra.mxu0 0.0
    %968 = vmatprep.subr.mxu0 0.0
    %969 = vmatpush1.msra.mxu0 0.0
    %970 = vmatprep.subr.mxu0 0.0
    %971 = vmatpush1.msra.mxu0 0.0
    %972 = vmatprep.subr.mxu0 0.0
    %973 = vmatpush1.msra.mxu0 0.0
    %974 = vmatprep.subr.mxu0 0.0
    %975 = vmatpush1.msra.mxu0 0.0
    %976 = vmatprep.subr.mxu0 0.0
    %977 = vmatpush1.msra.mxu0 0.0
    %978 = vmatprep.subr.mxu0 0.0
    %979 = vmatpush1.msra.mxu0 0.0
    %980 = vmatprep.subr.mxu0 0.0
    %981 = vmatpush1.msra.mxu0 0.0
    %982 = vmatprep.subr.mxu0 0.0
    %983 = vmatpush1.msra.mxu0 0.0
    %984 = vmatprep.subr.mxu0 0.0
    %985 = vmatpush1.msra.mxu0 0.0
    %986 = vmatprep.subr.mxu0 0.0
    %987 = vmatpush1.msra.mxu0 0.0
    %988 = vmatprep.subr.mxu0 0.0
    %989 = vmatpush1.msra.mxu0 0.0
    %990 = vmatprep.subr.mxu0 0.0
    %991 = vmatpush1.msra.mxu0 0.0
    %992 = vmatprep.subr.mxu0 0.0
    %993 = vmatpush1.msra.mxu0 0.0
    %994 = vmatprep.subr.mxu0 0.0
    %995 = vmatpush1.msra.mxu0 0.0
    %996 = vmatprep.mubr.f32.mxu0 0.0
    %997 = vmatmul.mubr.f32.gmra.mrb[0].mxu0 %v930
    %v998 = vpop.f32.mrb[0].mxu0
    %v999 = vadd.f32 %v93, %v998
    %v1000 = vpop.f32.mrb[0].mxu0
    %v1001 = vadd.f32 %v97, %v1000
    %1002 = vdwg.mxu0
    %v1003 = vmul.f32 %v999, %v70
    %v1004 = vmul.f32 %v1001, %v74
    %v1005 = vtanh.pop %v1003
    %v1006 = vtanh.pop %v1004
    %v1007 = vmul.f32 %v1005, 0.5
    %v1008 = vmul.f32 %v1006, 0.5
    %v1009 = vadd.f32 %v1007, 0.5
    %v1010 = vadd.f32 %v1008, 0.5
    %v1011 = vmul.f32 %v1009, %v924
    %v1012 = vmul.f32 %v1009, %v1006
    %1014 = vrot.lane.b32.xlu0 %v1012, 64
    %v1015 = vpop.permute.xlu0 %1014
    %v1017 = vadd.f32 %v1011, %v1015
    %v1018 = vtanh.pop %v1017
    %v1019 = vmul.f32 %v1010, %v1018
    %v1021 = vlaneseq
    %v1022 = vshrl.u32 %v1021, 7
    %v1023 = vsub.s32 0, %v1022
    %v1024 = vrot.slane %v80, %v1023
    %v1025 = vlaneseq
    %v1026 = vshrl.u32 %v1025, 7
    %v1027 = vsub.s32 1, %v1026
    %v1028 = vrot.slane %v80, %v1027
    %1032 = vrot.lane.b32.xlu0 %v1019, 64
    %v1033 = vpop.permute.xlu0 %1032
    %v1034 = vsel %vm278, %v1033, 0
    %1036 = vmatprep.subr.mxu0 %v48
    %1037 = vmatpush1.msra.mxu0 %v47
    %1038 = vmatprep.subr.mxu0 %v50
    %1039 = vmatpush1.msra.mxu0 %v49
    %1040 = vmatprep.subr.mxu0 %v52
    %1041 = vmatpush1.msra.mxu0 %v51
    %1042 = vmatprep.subr.mxu0 %v54
    %1043 = vmatpush1.msra.mxu0 %v53
    %1044 = vmatprep.subr.mxu0 %v56
    %1045 = vmatpush1.msra.mxu0 %v55
    %1046 = vmatprep.subr.mxu0 %v58
    %1047 = vmatpush1.msra.mxu0 %v57
    %1048 = vmatprep.subr.mxu0 %v60
    %1049 = vmatpush1.msra.mxu0 %v59
    %1050 = vmatprep.subr.mxu0 %v62
    %1051 = vmatpush1.msra.mxu0 %v61
    %1052 = vmatprep.subr.mxu0 0.0
    %1053 = vmatpush1.msra.mxu0 0.0
    %1054 = vmatprep.subr.mxu0 0.0
    %1055 = vmatpush1.msra.mxu0 0.0
    %1056 = vmatprep.subr.mxu0 0.0
    %1057 = vmatpush1.msra.mxu0 0.0
    %1058 = vmatprep.subr.mxu0 0.0
    %1059 = vmatpush1.msra.mxu0 0.0
    %1060 = vmatprep.subr.mxu0 0.0
    %1061 = vmatpush1.msra.mxu0 0.0
    %1062 = vmatprep.subr.mxu0 0.0
    %1063 = vmatpush1.msra.mxu0 0.0
    %1064 = vmatprep.subr.mxu0 0.0
    %1065 = vmatpush1.msra.mxu0 0.0
    %1066 = vmatprep.subr.mxu0 0.0
    %1067 = vmatpush1.msra.mxu0 0.0
    %1068 = vmatprep.subr.mxu0 0.0
    %1069 = vmatpush1.msra.mxu0 0.0
    %1070 = vmatprep.subr.mxu0 0.0
    %1071 = vmatpush1.msra.mxu0 0.0
    %1072 = vmatprep.subr.mxu0 0.0
    %1073 = vmatpush1.msra.mxu0 0.0
    %1074 = vmatprep.subr.mxu0 0.0
    %1075 = vmatpush1.msra.mxu0 0.0
    %1076 = vmatprep.subr.mxu0 0.0
    %1077 = vmatpush1.msra.mxu0 0.0
    %1078 = vmatprep.subr.mxu0 0.0
    %1079 = vmatpush1.msra.mxu0 0.0
    %1080 = vmatprep.subr.mxu0 0.0
    %1081 = vmatpush1.msra.mxu0 0.0
    %1082 = vmatprep.subr.mxu0 0.0
    %1083 = vmatpush1.msra.mxu0 0.0
    %1084 = vmatprep.subr.mxu0 0.0
    %1085 = vmatpush1.msra.mxu0 0.0
    %1086 = vmatprep.subr.mxu0 0.0
    %1087 = vmatpush1.msra.mxu0 0.0
    %1088 = vmatprep.subr.mxu0 0.0
    %1089 = vmatpush1.msra.mxu0 0.0
    %1090 = vmatprep.subr.mxu0 0.0
    %1091 = vmatpush1.msra.mxu0 0.0
    %1092 = vmatprep.subr.mxu0 0.0
    %1093 = vmatpush1.msra.mxu0 0.0
    %1094 = vmatprep.subr.mxu0 0.0
    %1095 = vmatpush1.msra.mxu0 0.0
    %1096 = vmatprep.subr.mxu0 0.0
    %1097 = vmatpush1.msra.mxu0 0.0
    %1098 = vmatprep.subr.mxu0 0.0
    %1099 = vmatpush1.msra.mxu0 0.0
    %1100 = vmatprep.mubr.f32.mxu0 0.0
    %1101 = vmatmul.mubr.f32.gmra.mrb[0].mxu0 %v1034
    %v1102 = vpop.f32.mrb[0].mxu0
    %v1103 = vadd.f32 %v1024, %v1102
    %v1104 = vpop.f32.mrb[0].mxu0
    %v1105 = vadd.f32 %v1028, %v1104
    %1106 = vdwg.mxu0
    %1107 = vst [vmem:[#allocation5] sm:$0xff] %v1103
    %1108 = vst [vmem:[#allocation5 + $0x8] sm:$0xff] %v1105
    // Predicated region
    $region18: #{tpu_custom_call.1} parent=1 // pred_check
      _
    $region19: #{tpu_custom_call.1} parent=1 // pred_check_branch
      %1110 = sbr.rel (0) target = $region21
    $region20: #{tpu_custom_call.1} parent=1 // pred_region
      %s1112 = ssub.s32 256, 256
      %1113 = vsyncadd [#allocation4], %s1112
      %s1115 = sshll.u32 [#allocation5], 4
      %s1116 = int_to_ptr.vmem [resolvable:$true] %s1115
      %1118 = dma.vmem_to_hbm [thread:$0]  %s1116, 256, %s3, [#allocation4]
    $region21: #{tpu_custom_call.1} parent=1 // pred_fallthru
      _
    // Predicated region
    $region22: #{tpu_custom_call.1} parent=1 // pred_check
      _
    $region23: #{tpu_custom_call.1} parent=1 // pred_check_branch
      %1120 = sbr.rel (0) target = $region25
    $region24: #{tpu_custom_call.1} parent=1 // pred_region
      %1121 = dma.done [#allocation4], 256
    $region25: #{tpu_custom_call.1} parent=1 // pred_fallthru
      _
    %1122 = vsyncpa [#allocation3], 1
    %1123 = vsyncpa [#allocation4], 1

</llo_original>
